<compile_context>
chip_gen: v5e
topology: v5e:2x2
jax: 0.10.0
libtpu: 0.0.40
codegen_flags: <defaults>
</compile_context>

<pallas_src>
import functools

import jax
import jax.numpy as jnp
from jax import lax
from jax.experimental import pallas as pl
from jax.experimental.pallas import tpu as pltpu

LRELU_SLOPE = 0.1
_HALO = 64                              # >= max(Q-1) = 40 and divides tile_t
VMEM_LIMIT_BYTES = 40 * 1024 * 1024


def _round_up(x, m):
    return (x + m - 1) // m * m


def _pick_max_tile_t():
    """Generation-aware output-time tile: 512 on 128 MiB VMEM parts (v5e/v6e),
    256 on 64 MiB parts (v7x) or if the query fails."""
    try:
        info = pltpu.get_tpu_info()
        vmem = getattr(info, "vmem_capacity_bytes", 0)
        if vmem and vmem >= 96 * 1024 * 1024:
            return 512
    except Exception:
        pass
    return 256


MAX_TILE_T = _pick_max_tile_t()


# ----------------------------------------------------------------------------
# Pallas kernel: one output-time tile of a (phase-folded, stride-1,
# block-diagonal-merged) grouped conv1d.  Grid = (B, n_tiles).
#   xm_ref : (1, TILE, Cfold)        main input rows of this tile     (bf16)
#   xh_ref : (1, HALO, Cfold)        halo rows just past the tile     (bf16)
#   w_ref  : (MG, Q, Cfold_m, Cout_m) merged weights, VMEM-resident   (bf16)
#   b_ref  : (1, Cout)               bias                             (f32)
#   o_ref  : (1, TILE, Cout)         canonical channels-last output   (bf16)
#   stage  : (TILE+HALO, Cfold)      contiguous staging window        (bf16)
#   acc    : (TILE, Cout)            f32 accumulator
# ----------------------------------------------------------------------------
def _gconv_kernel(xm_ref, xh_ref, w_ref, b_ref, o_ref, stage_ref, acc_ref, *,
                  n_mg, cfold_m, cout_m, q_taps, tile_t, apply_lrelu):
    # Stage main tile + halo contiguously so every tap is a plain
    # dynamic-offset slice.
    stage_ref[:tile_t, :] = xm_ref[0]
    stage_ref[tile_t:, :] = xh_ref[0]
    acc_ref[...] = jnp.zeros_like(acc_ref)

    def tap_body(q, carry):
        for g in range(n_mg):                      # static: 1..8 merged groups
            lhs = stage_ref[pl.ds(q, tile_t), g * cfold_m:(g + 1) * cfold_m]
            acc_ref[:, g * cout_m:(g + 1) * cout_m] += jnp.dot(
                lhs, w_ref[g, q], preferred_element_type=jnp.float32)
        return carry

    lax.fori_loop(0, q_taps, tap_body, 0, unroll=q_taps <= 8)

    y = acc_ref[...] + b_ref[...]                  # f32 epilogue
    if apply_lrelu:
        y = jnp.where(y >= 0.0, y, LRELU_SLOPE * y)
    o_ref[0] = y.astype(o_ref.dtype)


def conv1d_pallas(x, w, b, *, stride, padding, groups, merge, apply_lrelu):
    """Grouped Conv1d (+ optional leaky relu) via the tiled Pallas kernel.

    x: (B, T, Cin) channels-last activation (any float dtype)
    w: (Cout, Cin // groups, K)  PyTorch Conv1d weight layout (f32)
    b: (Cout,) f32
    merge: number of consecutive groups merged into one block-diagonal matmul.
    returns (B, T_out, Cout) bfloat16, canonical channels-last layout.
    """
    B, T, Cin = x.shape
    Cout, Cin_pg, K = w.shape
    G, s, m = groups, stride, merge
    assert Cin == Cin_pg * G and Cout % G == 0 and G % m == 0
    Cout_pg = Cout // G
    MG = G // m                      # merged-group count
    Cin_m = m * Cin_pg
    Cout_m = m * Cout_pg

    # Stride-phase folding: stride-s / K-tap conv -> stride-1 / Q-tap conv with
    # s*Cin channels (deeper MXU contraction, fewer taps).  Free for s>1.
    Q = -(-K // s)
    K_pad = Q * s
    Cfold = s * Cin
    Cfold_m = s * Cin_m

    T_out = (T + 2 * padding - K) // s + 1
    tile_t = min(MAX_TILE_T, _round_up(T_out, 64))
    nt = -(-T_out // tile_t)
    T_out_pad = nt * tile_t
    halo = _HALO
    U_pad = T_out_pad + halo
    total_in = U_pad * s

    # ---- host-side layout (1x data, no im2col) ----
    xb = x.astype(jnp.bfloat16)
    pad_r = total_in - padding - T
    assert pad_r >= 0
    x_cp = jnp.pad(xb, ((0, 0), (padding, pad_r), (0, 0)))   # (B, total_in, Cin)
    if s > 1:
        # folded channel = cin * s + phase  (channel-major, phase-minor)
        x_r = jnp.transpose(x_cp.reshape(B, U_pad, s, Cin),
                            (0, 1, 3, 2)).reshape(B, U_pad, Cfold)
    else:
        x_r = x_cp                                           # zero relayout

    # Block-diagonal merged weights: (MG, Q, Cfold_m, Cout_m).
    w_p = jnp.pad(w, ((0, 0), (0, 0), (0, K_pad - K)))
    w6 = w_p.reshape(MG, m, Cout_pg, Cin_pg, Q, s)
    eye = jnp.eye(m, dtype=w.dtype)
    w_r = jnp.einsum("agocqr,gh->aqgcrho", w6, eye).reshape(
        MG, Q, Cfold_m, Cout_m).astype(jnp.bfloat16)
    b_r = b.reshape(1, Cout).astype(jnp.float32)

    kernel = functools.partial(
        _gconv_kernel, n_mg=MG, cfold_m=Cfold_m, cout_m=Cout_m,
        q_taps=Q, tile_t=tile_t, apply_lrelu=apply_lrelu)

    # TODO(synk): v7x — single-buffer the weight/bias streams
    # (pipeline_mode=pl.Buffered(1)) and/or raise merge factors for 256x256
    # MXU shapes once VMEM headroom is verified.
    # TODO(synk): partial K-fold (2-4 taps into the contraction) for the
    # shallow-contraction layers would further cut tap count.
    out = pl.pallas_call(
        kernel,
        out_shape=jax.ShapeDtypeStruct((B, T_out_pad, Cout), jnp.bfloat16),
        grid_spec=pltpu.PrefetchScalarGridSpec(
            num_scalar_prefetch=0,
            grid=(B, nt),
            in_specs=[
                # main tile rows [i*TILE, (i+1)*TILE)
                pl.BlockSpec((1, tile_t, Cfold), lambda bb, i: (bb, i, 0)),
                # halo rows [(i+1)*TILE, (i+1)*TILE + HALO)  (same array again)
                pl.BlockSpec((1, halo, Cfold),
                             lambda bb, i: (bb, (i + 1) * (tile_t // halo), 0)),
                # weights + bias: constant index_map -> VMEM-resident
                pl.BlockSpec((MG, Q, Cfold_m, Cout_m),
                             lambda bb, i: (0, 0, 0, 0)),
                pl.BlockSpec((1, Cout), lambda bb, i: (0, 0)),
            ],
            out_specs=pl.BlockSpec((1, tile_t, Cout),
                                   lambda bb, i: (bb, i, 0)),
            scratch_shapes=[
                pltpu.VMEM((tile_t + halo, Cfold), jnp.bfloat16),
                pltpu.VMEM((tile_t, Cout), jnp.float32),
            ]),
        compiler_params=pltpu.CompilerParams(
            dimension_semantics=("parallel", "parallel"),
            vmem_limit_bytes=VMEM_LIMIT_BYTES),
    )(x_r, x_r, w_r, b_r)

    return out[:, :T_out, :]


# ----------------------------------------------------------------------------
# Special handling for the 1-lane layers.
# ----------------------------------------------------------------------------
def _first_conv(x, w, b, padding):
    """Conv1d(1, 128, 15, pad=7) + leaky relu: the mono signal is im2col'd
    (tiny: 15 copies of one channel) so the kernel sees a lane-dense
    (Cin=16 -> Cout=128) 1x1 matmul."""
    B, T, _ = x.shape
    Cout, _, K = w.shape
    xp = jnp.pad(x[..., 0], ((0, 0), (padding, padding)))       # (B, T+2p)
    T_out = T + 2 * padding - K + 1
    cols = jnp.stack([xp[:, k:k + T_out] for k in range(K)], axis=-1)
    Kc = _round_up(K, 16)
    cols = jnp.pad(cols, ((0, 0), (0, 0), (0, Kc - K)))          # (B, T, Kc)
    w_eff = jnp.pad(w.reshape(Cout, K), ((0, 0), (0, Kc - K)))
    w_eff = w_eff.reshape(Cout, Kc, 1)                           # 1x1 conv
    return conv1d_pallas(cols, w_eff, b, stride=1, padding=0, groups=1,
                         merge=1, apply_lrelu=True)


def _post_conv(x, w, b, padding):
    """Conv1d(1024, 1, 3, pad=1): the single output channel is padded to 128
    lanes (zero weights/bias), the lane-dense kernel runs, channel 0 sliced."""
    c_pad = 128
    w_eff = jnp.pad(w, ((0, c_pad - w.shape[0]), (0, 0), (0, 0)))
    b_eff = jnp.pad(b, ((0, c_pad - b.shape[0]),))
    y = conv1d_pallas(x, w_eff, b_eff, stride=1, padding=padding, groups=1,
                      merge=1, apply_lrelu=False)
    return y[:, :, :1]


def avg_pool1d_4_2_2(x):
    """AvgPool1d(kernel=4, stride=2, padding=2, count_include_pad=True) as
    plain XLA glue (1-lane data; not worth a Pallas launch)."""
    B, T, C = x.shape
    t_out = T // 2 + 1
    xp = jnp.pad(x, ((0, 0), (2, 2), (0, 0)))
    acc = sum(jax.lax.slice_in_dim(xp, k, k + 2 * (t_out - 1) + 1,
                                   stride=2, axis=1)
              for k in range(4))
    return 0.25 * acc


# ----------------------------------------------------------------------------
# DiscriminatorS / MultiScaleDiscriminator
# ----------------------------------------------------------------------------
_CONV_CFGS = [
    # (cin, cout, kernel, stride, pad, groups, merge)
    (1, 128, 15, 1, 7, 1, 1),        # handled by _first_conv
    (128, 128, 41, 2, 20, 4, 4),     # full merge  -> 256-deep x 128-wide
    (128, 256, 41, 2, 20, 16, 16),   # full merge  -> 256-deep x 256-wide
    (256, 512, 41, 4, 20, 16, 4),    # x4 merge    -> 256-deep x 128-wide
    (512, 1024, 41, 4, 20, 16, 2),   # x2 merge    -> 256-deep x 128-wide
    (1024, 1024, 41, 1, 20, 16, 2),  # x2 merge    -> 128-deep x 128-wide
    (1024, 1024, 5, 1, 2, 1, 1),     # already dense
]
_POST_CFG = (1024, 1, 3, 1, 1, 1, 1)


def init_discriminator_s(key):
    """Deterministic synthetic params (effective conv weights; weight_norm /
    spectral_norm are pure reparameterizations of the same effective weight)."""
    params = []
    cfgs = _CONV_CFGS + [_POST_CFG]
    keys = jax.random.split(key, len(cfgs))
    for kk, (cin, cout, ksz, stride, pad, groups, merge) in zip(keys, cfgs):
        wkey, bkey = jax.random.split(kk)
        cin_pg = cin // groups
        fan_in = float(cin_pg * ksz)
        w = jax.random.normal(wkey, (cout, cin_pg, ksz),
                              jnp.float32) / jnp.sqrt(fan_in)
        b = 0.01 * jax.random.normal(bkey, (cout,), jnp.float32)
        params.append(dict(w=w, b=b, stride=stride, pad=pad, groups=groups,
                           merge=merge))
    return params


def discriminator_s_forward(params, x):
    """x: (B, T, 1) f32 channels-last.
    Returns (flat logits (B, T_post) f32, fmap list channels-last bf16)."""
    fmap = []
    p0 = params[0]
    h = _first_conv(x, p0["w"], p0["b"], p0["pad"])
    fmap.append(h)
    for p in params[1:-1]:
        h = conv1d_pallas(h, p["w"], p["b"], stride=p["stride"],
                          padding=p["pad"], groups=p["groups"],
                          merge=p["merge"], apply_lrelu=True)
        fmap.append(h)
    pp = params[-1]
    h = _post_conv(h, pp["w"], pp["b"], pp["pad"])
    fmap.append(h)
    flat = h.reshape(h.shape[0], -1).astype(jnp.float32)  # torch.flatten(x,1,-1)
    return flat, fmap


def init_multi_scale_discriminator(key):
    keys = jax.random.split(key, 3)
    return [init_discriminator_s(k) for k in keys]


def multi_scale_discriminator_forward(all_params, y, y_hat):
    """y, y_hat: PyTorch layout (B, 1, T)."""
    y = jnp.transpose(y, (0, 2, 1)).astype(jnp.float32)       # (B, T, 1)
    y_hat = jnp.transpose(y_hat, (0, 2, 1)).astype(jnp.float32)
    B = y.shape[0]
    y_d_rs, y_d_gs, fmap_rs, fmap_gs = [], [], [], []
    for i, dparams in enumerate(all_params):
        if i != 0:
            y = avg_pool1d_4_2_2(y)
            y_hat = avg_pool1d_4_2_2(y_hat)
        # Batch y / y_hat together: one pallas_call per layer per scale.
        xcat = jnp.concatenate([y, y_hat], axis=0)
        flat, fmap = discriminator_s_forward(dparams, xcat)
        y_d_rs.append(flat[:B])
        y_d_gs.append(flat[B:])
        fmap_rs.append([f[:B] for f in fmap])
        fmap_gs.append([f[B:] for f in fmap])
    # NOTE: the reference PyTorch forward builds these lists but returns None;
    # we return them so the computed values are observable.
    return y_d_rs, y_d_gs, fmap_rs, fmap_gs


# ----------------------------------------------------------------------------
if __name__ == "__main__":
    key = jax.random.PRNGKey(0)
    pkey, k_y, k_yhat = jax.random.split(key, 3)

    B, T = 2, 128
    y = jax.random.normal(k_y, (B, 1, T), jnp.float32)        # PyTorch NCW
    y_hat = jax.random.normal(k_yhat, (B, 1, T), jnp.float32)

    params = init_multi_scale_discriminator(pkey)

    out = multi_scale_discriminator_forward(params, y, y_hat)
    jax.block_until_ready(out)

    print("KERNEL_OK")
</pallas_src>

<mosaic_0001>
module attributes {stable_mosaic.version = 11 : i64} {
  func.func @_gconv_kernel(%arg0: i32, %arg1: i32, %arg2: memref<1x128x16xbf16, #tpu.memory_space<vmem>>, %arg3: memref<1x64x16xbf16, #tpu.memory_space<vmem>>, %arg4: memref<1x1x16x128xbf16, #tpu.memory_space<vmem>>, %arg5: memref<1x128xf32, #tpu.memory_space<vmem>>, %arg6: memref<1x128x128xbf16, #tpu.memory_space<vmem>>, %arg7: memref<192x16xbf16, #tpu.memory_space<vmem>>, %arg8: memref<128x128xf32, #tpu.memory_space<vmem>>) attributes {dimension_semantics = [#tpu.dimension_semantics<parallel>, #tpu.dimension_semantics<parallel>], iteration_bounds = array<i64: 4, 1>, scalar_prefetch = 0 : i64, scratch_operands = 2 : i64, tpu.core_type = #tpu.core_type<tc>, window_params = [{transform_indices = @transform_0, window_bounds = array<i64: 1, 128, 16>}, {transform_indices = @transform_1, window_bounds = array<i64: 1, 64, 16>}, {pipeline_mode = #tpu.pipeline_mode<synchronous>, transform_indices = @transform_2, window_bounds = array<i64: 1, 1, 16, 128>}, {pipeline_mode = #tpu.pipeline_mode<synchronous>, transform_indices = @transform_3, window_bounds = array<i64: 1, 128>}, {transform_indices = @transform_4, window_bounds = array<i64: 1, 128, 128>}]} {
    %c0 = arith.constant 0 : index
    %c0_0 = arith.constant 0 : index
    %c0_1 = arith.constant 0 : index
    %0 = vector.load %arg2[%c0, %c0_0, %c0_1] : memref<1x128x16xbf16, #tpu.memory_space<vmem>>, vector<1x128x16xbf16>
    %1 = vector.shape_cast %0 : vector<1x128x16xbf16> to vector<128x16xbf16>
    %c0_2 = arith.constant 0 : index
    %c0_3 = arith.constant 0 : index
    %2 = vector.load %arg7[%c0_2, %c0_3] : memref<192x16xbf16, #tpu.memory_space<vmem>>, vector<128x16xbf16>
    tpu.vector_store %arg7[%c0_2, %c0_3], %1 {strides = array<i32>} : memref<192x16xbf16, #tpu.memory_space<vmem>>, vector<128x16xbf16>,
    %c0_4 = arith.constant 0 : index
    %c0_5 = arith.constant 0 : index
    %c0_6 = arith.constant 0 : index
    %3 = vector.load %arg3[%c0_4, %c0_5, %c0_6] : memref<1x64x16xbf16, #tpu.memory_space<vmem>>, vector<1x64x16xbf16>
    %4 = vector.shape_cast %3 : vector<1x64x16xbf16> to vector<64x16xbf16>
    %c128 = arith.constant 128 : index
    %c0_7 = arith.constant 0 : index
    %5 = vector.load %arg7[%c128, %c0_7] : memref<192x16xbf16, #tpu.memory_space<vmem>>, vector<64x16xbf16>
    tpu.vector_store %arg7[%c128, %c0_7], %4 {strides = array<i32>} : memref<192x16xbf16, #tpu.memory_space<vmem>>, vector<64x16xbf16>,
    %cst = arith.constant 0.000000e+00 : f32
    %6 = vector.broadcast %cst : f32 to vector<128x128xf32>
    %c0_8 = arith.constant 0 : index
    %c0_9 = arith.constant 0 : index
    %7 = vector.load %arg8[%c0_8, %c0_9] : memref<128x128xf32, #tpu.memory_space<vmem>>, vector<128x128xf32>
    tpu.vector_store %arg8[%c0_8, %c0_9], %6 {strides = array<i32>} : memref<128x128xf32, #tpu.memory_space<vmem>>, vector<128x128xf32>,
    %c0_i32 = arith.constant 0 : i32
    %8 = arith.index_cast %c0_i32 : i32 to index
    %c0_10 = arith.constant 0 : index
    %9 = vector.load %arg7[%8, %c0_10] : memref<192x16xbf16, #tpu.memory_space<vmem>>, vector<128x16xbf16>
    %c0_11 = arith.constant 0 : index
    %c0_12 = arith.constant 0 : index
    %10 = vector.load %arg8[%c0_11, %c0_12] : memref<128x128xf32, #tpu.memory_space<vmem>>, vector<128x128xf32>
    %c0_13 = arith.constant 0 : index
    %11 = arith.index_cast %c0_i32 : i32 to index
    %c0_14 = arith.constant 0 : index
    %c0_15 = arith.constant 0 : index
    %12 = vector.load %arg4[%c0_13, %11, %c0_14, %c0_15] : memref<1x1x16x128xbf16, #tpu.memory_space<vmem>>, vector<1x1x16x128xbf16>
    %13 = vector.shape_cast %12 : vector<1x1x16x128xbf16> to vector<16x128xbf16>
    %cst_16 = arith.constant dense<0.000000e+00> : vector<128x128xf32>
    %14 = tpu.matmul %9, %13, %cst_16 {dimension_numbers = #tpu.dot_dimension_numbers<[1], [0], [0], [1], [0, 0, 1, 1], [], []>} : vector<128x16xbf16>, vector<16x128xbf16>, vector<128x128xf32> -> vector<128x128xf32>
    %15 = arith.addf %10, %14 : vector<128x128xf32>
    %c0_17 = arith.constant 0 : index
    %c0_18 = arith.constant 0 : index
    %16 = vector.load %arg8[%c0_17, %c0_18] : memref<128x128xf32, #tpu.memory_space<vmem>>, vector<128x128xf32>
    tpu.vector_store %arg8[%c0_17, %c0_18], %15 {strides = array<i32>} : memref<128x128xf32, #tpu.memory_space<vmem>>, vector<128x128xf32>,
    %c1_i32 = arith.constant 1 : i32
    %c0_19 = arith.constant 0 : index
    %c0_20 = arith.constant 0 : index
    %17 = vector.load %arg8[%c0_19, %c0_20] : memref<128x128xf32, #tpu.memory_space<vmem>>, vector<128x128xf32>
    %c0_21 = arith.constant 0 : index
    %c0_22 = arith.constant 0 : index
    %18 = vector.load %arg5[%c0_21, %c0_22] : memref<1x128xf32, #tpu.memory_space<vmem>>, vector<1x128xf32>
    %19 = vector.broadcast %18 : vector<1x128xf32> to vector<128x128xf32>
    %20 = arith.addf %17, %19 : vector<128x128xf32>
    %cst_23 = arith.constant 0.000000e+00 : f32
    %21 = vector.broadcast %cst_23 : f32 to vector<128x128xf32>
    %22 = arith.cmpf oge, %20, %21 : vector<128x128xf32>
    %cst_24 = arith.constant 1.000000e-01 : f32
    %23 = vector.broadcast %cst_24 : f32 to vector<128x128xf32>
    %24 = arith.mulf %23, %20 : vector<128x128xf32>
    %25 = arith.select %22, %20, %24 : vector<128x128xi1>, vector<128x128xf32>
    %26 = arith.truncf %25 : vector<128x128xf32> to vector<128x128xbf16>
    %c0_25 = arith.constant 0 : index
    %c0_26 = arith.constant 0 : index
    %c0_27 = arith.constant 0 : index
    %27 = vector.load %arg6[%c0_25, %c0_26, %c0_27] : memref<1x128x128xbf16, #tpu.memory_space<vmem>>, vector<1x128x128xbf16>
    %28 = vector.shape_cast %27 : vector<1x128x128xbf16> to vector<128x128xbf16>
    %29 = vector.shape_cast %26 : vector<128x128xbf16> to vector<1x128x128xbf16>
    tpu.vector_store %arg6[%c0_25, %c0_26, %c0_27], %29 {strides = array<i32>} : memref<1x128x128xbf16, #tpu.memory_space<vmem>>, vector<1x128x128xbf16>,
    return
  }
  func.func @transform_0(%arg0: i32, %arg1: i32) -> (i32, i32, i32) {
    %c0_i32 = arith.constant 0 : i32
    %c0_i32_0 = arith.constant 0 : i32
    return %arg0, %arg1, %c0_i32 : i32, i32, i32
  }
  func.func @transform_1(%arg0: i32, %arg1: i32) -> (i32, i32, i32) {
    %c1_i32 = arith.constant 1 : i32
    %0 = arith.addi %arg1, %c1_i32 : i32
    %c2_i32 = arith.constant 2 : i32
    %1 = arith.muli %0, %c2_i32 : i32
    %c0_i32 = arith.constant 0 : i32
    %c0_i32_0 = arith.constant 0 : i32
    return %arg0, %1, %c0_i32 : i32, i32, i32
  }
  func.func @transform_2(%arg0: i32, %arg1: i32) -> (i32, i32, i32, i32) {
    %c0_i32 = arith.constant 0 : i32
    %c0_i32_0 = arith.constant 0 : i32
    %c0_i32_1 = arith.constant 0 : i32
    %c0_i32_2 = arith.constant 0 : i32
    %c0_i32_3 = arith.constant 0 : i32
    return %c0_i32, %c0_i32_0, %c0_i32_1, %c0_i32_2 : i32, i32, i32, i32
  }
  func.func @transform_3(%arg0: i32, %arg1: i32) -> (i32, i32) {
    %c0_i32 = arith.constant 0 : i32
    %c0_i32_0 = arith.constant 0 : i32
    %c0_i32_1 = arith.constant 0 : i32
    return %c0_i32, %c0_i32_0 : i32, i32
  }
  func.func @transform_4(%arg0: i32, %arg1: i32) -> (i32, i32, i32) {
    %c0_i32 = arith.constant 0 : i32
    %c0_i32_0 = arith.constant 0 : i32
    return %arg0, %arg1, %c0_i32 : i32, i32, i32
  }
}

</mosaic_0001>

<llo_original>
// kernel: tpu_custom_call.1
$region0: #{tpu_custom_call.1}
  #allocation0 [shape = 'u32[]', space=smem, size = 0x4, offset = 0x4, fixed_abs, tag = 'smem constant byte address 0x4 - core index']
  #allocation1 [shape = 'u32[72,128]{1,0:T(1,128)}', space=vmem, size = 0x9000, scoped, tag = 'internal scratch']
  #allocation2 [shape = 'bf16[192,16]{1,0:T(8,128)(2,1)}', space=vmem, size = 0xc000, scoped, tag = 'scratch operand']
  #allocation3 [shape = 'f32[128,128]{1,0:T(8,128)}', space=vmem, size = 0x10000, scoped, tag = 'scratch operand']
  %s0 = inlined_call_operand.vmem [shape: bf16[4,192,16], index: 0, kind: input, shape index: {}]
  %s1 = inlined_call_operand.vmem [shape: bf16[4,192,16], index: 1, kind: input, shape index: {}]
  %s2 = inlined_call_operand.vmem [shape: bf16[1,1,16,128], index: 2, kind: input, shape index: {}]
  %s3 = inlined_call_operand.vmem [shape: f32[1,128], index: 3, kind: input, shape index: {}]
  %s4 = inlined_call_operand.hbm [shape: bf16[4,128,128], index: 4, kind: output, shape index: {}]
  %s5 = sld [smem:[#allocation0]]
  $region49: #{tpu_custom_call.1} parent=0
    _
  %s7 = ssub.s32 1, %s5
  %s8 = scalar_select 0, %s7, %s5
  $region1: #{tpu_custom_call.1} parent=0
    #allocation4 [shape = 'u8[65536]{0}', space=vmem, size = 0x10000, scoped, tag = 'output window, operand 0']
    #allocation5 [shape = 's32[2]{0}', space=sflag, size = 0x8, scoped, tag = 'scoped memory for tpu_custom_call.1']
    %9 = vsyncpa [#allocation5], 0
    %s10 = scalar_lea.sflag [#allocation5], 1
    %11 = vsyncpa %s10, 0
    loop: start=0, step=1, limit=6
    $region2: #{tpu_custom_call.1} parent=1 // loop_pre_header
      _
    $region3: #{tpu_custom_call.1} parent=1 // loop_header
      %s13 = sphi 0, %s17
      %p14 = scmp.ge.s32.totalorder %s13, 6
      %s20 = sphi 0, %s32
      %s21 = sphi 0, %s28
      %s22 = sphi 0, %s20
      %s23 = sphi 0, %s21
      %s24 = sphi 0, %s22
      %s25 = sphi 0, %s23
      %s37 = sphi 0, %s39
      %s40 = sphi 0, %s37
      %s41 = sphi 0, %s40
      %s57 = sphi 0, %s41
      %s69 = sphi 0, %s71
      %s72 = sphi 0, %s69
      %s73 = sphi 0, %s72
      %s89 = sphi 0, %s73
      %s93 = sphi 0, %s93
      %s95 = sphi 0, %s93
      %s96 = sphi 0, %s95
      %s110 = sphi 0, %s96
      %s114 = sphi 0, %s114
      %s116 = sphi 0, %s114
      %s117 = sphi 0, %s116
      %s131 = sphi 0, %s117
      %s139 = sphi 0, %s141
      %s142 = sphi 0, %s139
      %s143 = sphi 0, %s142
      %s159 = sphi 0, %s143
    $region4: #{tpu_custom_call.1} parent=1 // loop_header_branch
      %16 = sbr.rel (%p14) target = $region8
    $region5: #{tpu_custom_call.1} parent=1 // loop_body
      %s18 = ssub.s32 %s13, 1
      %s19 = ssub.s32 %s13, 2
      %s26 = sadd.s32 1, %s21
      %p27 = scmp.ge.s32.totalorder %s26, 1
      %s28 = scalar_select %p27, 0, %s26
      %s29 = sadd.s32 1, %s20
      %s30 = scalar_select %p27, %s29, %s20
      %p31 = scmp.ge.s32.totalorder %s30, 4
      %s32 = scalar_select %p31, 0, %s30
      %s33 = ssub.s32 %s20, %s32
      %s34 = ssub.s32 %s21, %s28
      %s35 = sor.u32 %s33, %s34
      %p36 = scmp.eq.s32.totalorder %s35, 0
      %s38 = sadd.s32 %s37, 1
      %s39 = scalar_select %p36, %s37, %s38
      %p42 = pneg %p36
      %p43 = scmp.eq.s32.totalorder %s13, 3
      %p44 = por %p42, %p43
      %p45 = scmp.ne.s32.totalorder %s37, %s40
      %p46 = scmp.eq.s32.totalorder %s13, 0
      %p47 = por %p45, %p46
      %p48 = scmp.ne.s32.totalorder %s37, %s40
      %p49 = scmp.eq.s32.totalorder %s18, 3
      %p50 = por %p48, %p49
      %p51 = scmp.ne.s32.totalorder %s40, %s41
      %p52 = scmp.eq.s32.totalorder %s18, 0
      %p53 = por %p51, %p52
      %p54 = scmp.ne.s32.totalorder %s40, %s41
      %p55 = scmp.eq.s32.totalorder %s19, 3
      %p56 = por %p54, %p55
      %p58 = scmp.ne.s32.totalorder %s41, %s57
      %p59 = scmp.eq.s32.totalorder %s19, 0
      %p60 = por %p58, %p59
      %s61 = sadd.s32 %s21, 1
      %s62 = smul.u32 %s61, 2
      %s63 = sadd.s32 %s28, 1
      %s64 = smul.u32 %s63, 2
      %s65 = ssub.s32 %s20, %s32
      %s66 = ssub.s32 %s62, %s64
      %s67 = sor.u32 %s65, %s66
      %p68 = scmp.eq.s32.totalorder %s67, 0
      %s70 = sadd.s32 %s69, 1
      %s71 = scalar_select %p68, %s69, %s70
      %p74 = pneg %p68
      %p75 = scmp.eq.s32.totalorder %s13, 3
      %p76 = por %p74, %p75
      %p77 = scmp.ne.s32.totalorder %s69, %s72
      %p78 = scmp.eq.s32.totalorder %s13, 0
      %p79 = por %p77, %p78
      %p80 = scmp.ne.s32.totalorder %s69, %s72
      %p81 = scmp.eq.s32.totalorder %s18, 3
      %p82 = por %p80, %p81
      %p83 = scmp.ne.s32.totalorder %s72, %s73
      %p84 = scmp.eq.s32.totalorder %s18, 0
      %p85 = por %p83, %p84
      %p86 = scmp.ne.s32.totalorder %s72, %s73
      %p87 = scmp.eq.s32.totalorder %s19, 3
      %p88 = por %p86, %p87
      %p90 = scmp.ne.s32.totalorder %s73, %s89
      %p91 = scmp.eq.s32.totalorder %s19, 0
      %p92 = por %p90, %p91
      %s94 = sadd.s32 %s93, 1
      %p97 = scmp.eq.s32.totalorder %s13, 3
      %p98 = scmp.ne.s32.totalorder %s93, %s95
      %p99 = scmp.eq.s32.totalorder %s13, 0
      %p100 = por %p98, %p99
      %p101 = scmp.ne.s32.totalorder %s93, %s95
      %p102 = scmp.eq.s32.totalorder %s18, 3
      %p103 = por %p101, %p102
      %p104 = scmp.ne.s32.totalorder %s95, %s96
      %p105 = scmp.eq.s32.totalorder %s18, 0
      %p106 = por %p104, %p105
      %p107 = scmp.ne.s32.totalorder %s95, %s96
      %p108 = scmp.eq.s32.totalorder %s19, 3
      %p109 = por %p107, %p108
      %p111 = scmp.ne.s32.totalorder %s96, %s110
      %p112 = scmp.eq.s32.totalorder %s19, 0
      %p113 = por %p111, %p112
      %s115 = sadd.s32 %s114, 1
      %p118 = scmp.eq.s32.totalorder %s13, 3
      %p119 = scmp.ne.s32.totalorder %s114, %s116
      %p120 = scmp.eq.s32.totalorder %s13, 0
      %p121 = por %p119, %p120
      %p122 = scmp.ne.s32.totalorder %s114, %s116
      %p123 = scmp.eq.s32.totalorder %s18, 3
      %p124 = por %p122, %p123
      %p125 = scmp.ne.s32.totalorder %s116, %s117
      %p126 = scmp.eq.s32.totalorder %s18, 0
      %p127 = por %p125, %p126
      %p128 = scmp.ne.s32.totalorder %s116, %s117
      %p129 = scmp.eq.s32.totalorder %s19, 3
      %p130 = por %p128, %p129
      %p132 = scmp.ne.s32.totalorder %s117, %s131
      %p133 = scmp.eq.s32.totalorder %s19, 0
      %p134 = por %p132, %p133
      %s135 = ssub.s32 %s20, %s32
      %s136 = ssub.s32 %s21, %s28
      %s137 = sor.u32 %s135, %s136
      %p138 = scmp.eq.s32.totalorder %s137, 0
      %s140 = sadd.s32 %s139, 1
      %s141 = scalar_select %p138, %s139, %s140
      %p144 = pneg %p138
      %p145 = scmp.eq.s32.totalorder %s13, 3
      %p146 = por %p144, %p145
      %p147 = scmp.ne.s32.totalorder %s139, %s142
      %p148 = scmp.eq.s32.totalorder %s13, 0
      %p149 = por %p147, %p148
      %p150 = scmp.ne.s32.totalorder %s139, %s142
      %p151 = scmp.eq.s32.totalorder %s18, 3
      %p152 = por %p150, %p151
      %p153 = scmp.ne.s32.totalorder %s142, %s143
      %p154 = scmp.eq.s32.totalorder %s18, 0
      %p155 = por %p153, %p154
      %p156 = scmp.ne.s32.totalorder %s142, %s143
      %p157 = scmp.eq.s32.totalorder %s19, 3
      %p158 = por %p156, %p157
      %p160 = scmp.ne.s32.totalorder %s143, %s159
      %p161 = scmp.eq.s32.totalorder %s19, 0
      %p162 = por %p160, %p161
      %p163 = scmp.le.s32.totalorder 1, %s13
      %p164 = scmp.lt.s32.totalorder %s13, 5
      %p165 = pnand %p163, %p164
      %p166 = pneg %p165
      // Predicated region
      $region9: #{tpu_custom_call.1} parent=5 // pred_check
        _
      $region10: #{tpu_custom_call.1} parent=5 // pred_check_branch
        %168 = sbr.rel (%p165) target = $region12
      $region11: #{tpu_custom_call.1} parent=5 // pred_region
        %s169 = ssub.s32 %s13, 1
        // Predicated region
        $region13: #{tpu_custom_call.1} parent=11 // pred_check
          %p170 = pneg %p106
        $region14: #{tpu_custom_call.1} parent=11 // pred_check_branch
          %172 = sbr.rel (%p170) target = $region16
        $region15: #{tpu_custom_call.1} parent=11 // pred_region
          _
        $region16: #{tpu_custom_call.1} parent=11 // pred_fallthru
          _
        // Predicated region
        $region17: #{tpu_custom_call.1} parent=11 // pred_check
          %p173 = pneg %p127
        $region18: #{tpu_custom_call.1} parent=11 // pred_check_branch
          %175 = sbr.rel (%p173) target = $region20
        $region19: #{tpu_custom_call.1} parent=11 // pred_region
          _
        $region20: #{tpu_custom_call.1} parent=11 // pred_fallthru
          _
      $region12: #{tpu_custom_call.1} parent=5 // pred_fallthru
        _
      %p176 = scmp.lt.s32.totalorder %s13, 4
      // Predicated region
      $region21: #{tpu_custom_call.1} parent=5 // pred_check
        %p177 = pneg %p176
      $region22: #{tpu_custom_call.1} parent=5 // pred_check_branch
        %179 = sbr.rel (%p177) target = $region24
      $region23: #{tpu_custom_call.1} parent=5 // pred_region
        // Predicated region
        $region25: #{tpu_custom_call.1} parent=23 // pred_check
          %p180 = pneg %p47
        $region26: #{tpu_custom_call.1} parent=23 // pred_check_branch
          %182 = sbr.rel (%p180) target = $region28
        $region27: #{tpu_custom_call.1} parent=23 // pred_region
          %s183 = smul.u32 16, %s21
          %s184 = ssub.s32 24, %s183
          %p185 = scmp.lt.s32.totalorder %s184, 16
          %s186 = scalar_select %p185, %s184, 16
          %s187 = smul.u32 4, %s186
          %p188 = scmp.lt.s32.totalorder %s20, 3
          %s189 = scalar_select %p188, %s20, 3
          %p190 = scmp.lt.s32.totalorder %s183, 23
          %s191 = scalar_select %p190, %s183, 23
          %s192 = smul.addr %s189, 24
          %s193 = sadd.s32 %s191, %s192
          %s194 = smul.addr %s193, 4
          %s195 = scalar_lea.vmem %s0, %s194
          %s196 = smul.u32 16, %s21
          %s197 = ssub.s32 24, %s196
          %p198 = scmp.lt.s32.totalorder %s197, 16
          %s199 = scalar_select %p198, %s197, 16
          %s200 = smul.u32 4, %s199
        $region28: #{tpu_custom_call.1} parent=23 // pred_fallthru
          _
        // Predicated region
        $region29: #{tpu_custom_call.1} parent=23 // pred_check
          %p201 = pneg %p79
        $region30: #{tpu_custom_call.1} parent=23 // pred_check_branch
          %203 = sbr.rel (%p201) target = $region32
        $region31: #{tpu_custom_call.1} parent=23 // pred_region
          %s204 = sadd.s32 %s21, 1
          %s205 = smul.u32 %s204, 2
          %s206 = smul.u32 8, %s205
          %p207 = scmp.lt.s32.totalorder %s20, 3
          %s208 = scalar_select %p207, %s20, 3
          %p209 = scmp.lt.s32.totalorder %s206, 23
          %s210 = scalar_select %p209, %s206, 23
          %s211 = smul.addr %s208, 24
          %s212 = sadd.s32 %s210, %s211
          %s213 = smul.addr %s212, 4
          %s214 = scalar_lea.vmem %s1, %s213
          %s215 = sadd.s32 %s21, 1
          %s216 = smul.u32 %s215, 2
          %s217 = smul.u32 8, %s216
        $region32: #{tpu_custom_call.1} parent=23 // pred_fallthru
          _
      $region24: #{tpu_custom_call.1} parent=5 // pred_fallthru
        _
      %p218 = scmp.le.s32.totalorder 1, %s13
      %p219 = scmp.lt.s32.totalorder %s13, 5
      %p220 = pnand %p218, %p219
      %p221 = pneg %p220
      // Predicated region
      $region33: #{tpu_custom_call.1} parent=5 // pred_check
        _
      $region34: #{tpu_custom_call.1} parent=5 // pred_check_branch
        %223 = sbr.rel (%p220) target = $region36
      $region35: #{tpu_custom_call.1} parent=5 // pred_region
        %s224 = ssub.s32 %s13, 1
        %s225 = smul.u32 16, %s23
        %s226 = ssub.s32 24, %s225
        %p227 = scmp.lt.s32.totalorder %s226, 16
        %s228 = scalar_select %p227, %s226, 16
        %s229 = smul.u32 4, %s228
        %p230 = scmp.lt.s32.totalorder %s22, 3
        %s231 = scalar_select %p230, %s22, 3
        %p232 = scmp.lt.s32.totalorder %s225, 23
        %s233 = scalar_select %p232, %s225, 23
        %s234 = smul.addr %s231, 24
        %s235 = sadd.s32 %s233, %s234
        %s236 = smul.addr %s235, 4
        %s237 = scalar_lea.vmem %s0, %s236
        %p238 = pneg %p53
        %p239 = pneg %p50
        %s240 = sadd.s32 %s23, 1
        %s241 = smul.u32 %s240, 2
        %s242 = smul.u32 8, %s241
        %p243 = scmp.lt.s32.totalorder %s22, 3
        %s244 = scalar_select %p243, %s22, 3
        %p245 = scmp.lt.s32.totalorder %s242, 23
        %s246 = scalar_select %p245, %s242, 23
        %s247 = smul.addr %s244, 24
        %s248 = sadd.s32 %s246, %s247
        %s249 = smul.addr %s248, 4
        %s250 = scalar_lea.vmem %s1, %s249
        %p251 = pneg %p85
        %p252 = pneg %p82
        %p253 = pneg %p106
        %p254 = pneg %p103
        %p255 = pneg %p127
        %p256 = pneg %p124
        %p257 = pneg %p155
        %p258 = pneg %p152
        %s259 = sand.u32 %s142, 1
        %s260 = scalar_lea.sflag [#allocation5], %s259
        %s261 = sand.u32 %s142, 1
        %s262 = smul.addr %s261, 64
        %s263 = scalar_lea.vmem [#allocation4], %s262
        %s264 = smul.u32 16, %s23
        %s265 = ssub.s32 24, %s264
        %p266 = scmp.lt.s32.totalorder %s265, 16
        %s267 = scalar_select %p266, %s265, 16
        %s268 = smul.u32 4, %s267
        %p269 = scmp.lt.s32.totalorder %s22, 3
        %s270 = scalar_select %p269, %s22, 3
        %p271 = scmp.lt.s32.totalorder %s264, 23
        %s272 = scalar_select %p271, %s264, 23
        %s273 = smul.addr %s270, 24
        %s274 = sadd.s32 %s272, %s273
        %s275 = smul.addr %s274, 4
        %s276 = scalar_lea.vmem %s0, %s275
        %s277 = smul.u32 16, %s23
        %s278 = ssub.s32 24, %s277
        %p279 = scmp.lt.s32.totalorder %s278, 16
        %s280 = scalar_select %p279, %s278, 16
        %s281 = smul.u32 4, %s280
        %s282 = sadd.s32 %s23, 1
        %s283 = smul.u32 %s282, 2
        %s284 = smul.u32 8, %s283
        %p285 = scmp.lt.s32.totalorder %s22, 3
        %s286 = scalar_select %p285, %s22, 3
        %p287 = scmp.lt.s32.totalorder %s284, 23
        %s288 = scalar_select %p287, %s284, 23
        %s289 = smul.addr %s286, 24
        %s290 = sadd.s32 %s288, %s289
        %s291 = smul.addr %s290, 4
        %s292 = scalar_lea.vmem %s1, %s291
        %s293 = sadd.s32 %s23, 1
        %s294 = smul.u32 %s293, 2
        %s295 = smul.u32 8, %s294
        %s296 = smul.u32 16, %s23
        %v298 = vld [vmem:[%s276] sm:$0xf]
        %v299 = vld [vmem:[%s276 + $0x4] sm:$0xf]
        %v300 = vld [vmem:[%s276 + $0x8] sm:$0xf]
        %v301 = vld [vmem:[%s276 + $0xc] sm:$0xf]
        %v302 = vld [vmem:[%s276 + $0x10] sm:$0xf]
        %v303 = vld [vmem:[%s276 + $0x14] sm:$0xf]
        %v304 = vld [vmem:[%s276 + $0x18] sm:$0xf]
        %v305 = vld [vmem:[%s276 + $0x1c] sm:$0xf]
        %v306 = vld [vmem:[%s276 + $0x20] sm:$0xf]
        %v307 = vld [vmem:[%s276 + $0x24] sm:$0xf]
        %v308 = vld [vmem:[%s276 + $0x28] sm:$0xf]
        %v309 = vld [vmem:[%s276 + $0x2c] sm:$0xf]
        %v310 = vld [vmem:[%s276 + $0x30] sm:$0xf]
        %v311 = vld [vmem:[%s276 + $0x34] sm:$0xf]
        %v312 = vld [vmem:[%s276 + $0x38] sm:$0xf]
        %v313 = vld [vmem:[%s276 + $0x3c] sm:$0xf]
        %vm314 = vcmask 125952
        %315 = vst.msk [vmem:[#allocation2] sm:$0xf] %vm314, %v298
        %316 = vst.msk [vmem:[#allocation2 + $0x4] sm:$0xf] %vm314, %v299
        %317 = vst.msk [vmem:[#allocation2 + $0x8] sm:$0xf] %vm314, %v300
        %318 = vst.msk [vmem:[#allocation2 + $0xc] sm:$0xf] %vm314, %v301
        %319 = vst.msk [vmem:[#allocation2 + $0x10] sm:$0xf] %vm314, %v302
        %320 = vst.msk [vmem:[#allocation2 + $0x14] sm:$0xf] %vm314, %v303
        %321 = vst.msk [vmem:[#allocation2 + $0x18] sm:$0xf] %vm314, %v304
        %322 = vst.msk [vmem:[#allocation2 + $0x1c] sm:$0xf] %vm314, %v305
        %323 = vst.msk [vmem:[#allocation2 + $0x20] sm:$0xf] %vm314, %v306
        %324 = vst.msk [vmem:[#allocation2 + $0x24] sm:$0xf] %vm314, %v307
        %325 = vst.msk [vmem:[#allocation2 + $0x28] sm:$0xf] %vm314, %v308
        %326 = vst.msk [vmem:[#allocation2 + $0x2c] sm:$0xf] %vm314, %v309
        %327 = vst.msk [vmem:[#allocation2 + $0x30] sm:$0xf] %vm314, %v310
        %328 = vst.msk [vmem:[#allocation2 + $0x34] sm:$0xf] %vm314, %v311
        %329 = vst.msk [vmem:[#allocation2 + $0x38] sm:$0xf] %vm314, %v312
        %330 = vst.msk [vmem:[#allocation2 + $0x3c] sm:$0xf] %vm314, %v313
        %v331 = vld [vmem:[%s292] sm:$0xf]
        %v332 = vld [vmem:[%s292 + $0x4] sm:$0xf]
        %v333 = vld [vmem:[%s292 + $0x8] sm:$0xf]
        %v334 = vld [vmem:[%s292 + $0xc] sm:$0xf]
        %v335 = vld [vmem:[%s292 + $0x10] sm:$0xf]
        %v336 = vld [vmem:[%s292 + $0x14] sm:$0xf]
        %v337 = vld [vmem:[%s292 + $0x18] sm:$0xf]
        %v338 = vld [vmem:[%s292 + $0x1c] sm:$0xf]
        %339 = vst.msk [vmem:[#allocation2 + $0x40] sm:$0xf] %vm314, %v331
        %340 = vst.msk [vmem:[#allocation2 + $0x44] sm:$0xf] %vm314, %v332
        %341 = vst.msk [vmem:[#allocation2 + $0x48] sm:$0xf] %vm314, %v333
        %342 = vst.msk [vmem:[#allocation2 + $0x4c] sm:$0xf] %vm314, %v334
        %343 = vst.msk [vmem:[#allocation2 + $0x50] sm:$0xf] %vm314, %v335
        %344 = vst.msk [vmem:[#allocation2 + $0x54] sm:$0xf] %vm314, %v336
        %345 = vst.msk [vmem:[#allocation2 + $0x58] sm:$0xf] %vm314, %v337
        %346 = vst.msk [vmem:[#allocation2 + $0x5c] sm:$0xf] %vm314, %v338
        %347 = vst [vmem:[#allocation3] sm:$0xff] 0.0
        %348 = vst [vmem:[#allocation3 + $0x8] sm:$0xff] 0.0
        %349 = vst [vmem:[#allocation3 + $0x10] sm:$0xff] 0.0
        %350 = vst [vmem:[#allocation3 + $0x18] sm:$0xff] 0.0
        %351 = vst [vmem:[#allocation3 + $0x20] sm:$0xff] 0.0
        %352 = vst [vmem:[#allocation3 + $0x28] sm:$0xff] 0.0
        %353 = vst [vmem:[#allocation3 + $0x30] sm:$0xff] 0.0
        %354 = vst [vmem:[#allocation3 + $0x38] sm:$0xff] 0.0
        %355 = vst [vmem:[#allocation3 + $0x40] sm:$0xff] 0.0
        %356 = vst [vmem:[#allocation3 + $0x48] sm:$0xff] 0.0
        %357 = vst [vmem:[#allocation3 + $0x50] sm:$0xff] 0.0
        %358 = vst [vmem:[#allocation3 + $0x58] sm:$0xff] 0.0
        %359 = vst [vmem:[#allocation3 + $0x60] sm:$0xff] 0.0
        %360 = vst [vmem:[#allocation3 + $0x68] sm:$0xff] 0.0
        %361 = vst [vmem:[#allocation3 + $0x70] sm:$0xff] 0.0
        %362 = vst [vmem:[#allocation3 + $0x78] sm:$0xff] 0.0
        %v363 = vld [vmem:[#allocation2] sm:$0xf]
        %v364 = vld [vmem:[#allocation2 + $0x4] sm:$0xf]
        %v365 = vld [vmem:[#allocation2 + $0x8] sm:$0xf]
        %v366 = vld [vmem:[#allocation2 + $0xc] sm:$0xf]
        %v367 = vld [vmem:[#allocation2 + $0x10] sm:$0xf]
        %v368 = vld [vmem:[#allocation2 + $0x14] sm:$0xf]
        %v369 = vld [vmem:[#allocation2 + $0x18] sm:$0xf]
        %v370 = vld [vmem:[#allocation2 + $0x1c] sm:$0xf]
        %v371 = vld [vmem:[#allocation2 + $0x20] sm:$0xf]
        %v372 = vld [vmem:[#allocation2 + $0x24] sm:$0xf]
        %v373 = vld [vmem:[#allocation2 + $0x28] sm:$0xf]
        %v374 = vld [vmem:[#allocation2 + $0x2c] sm:$0xf]
        %v375 = vld [vmem:[#allocation2 + $0x30] sm:$0xf]
        %v376 = vld [vmem:[#allocation2 + $0x34] sm:$0xf]
        %v377 = vld [vmem:[#allocation2 + $0x38] sm:$0xf]
        %v378 = vld [vmem:[#allocation2 + $0x3c] sm:$0xf]
        %v379 = vld [vmem:[#allocation3] sm:$0xff]
        %v380 = vld [vmem:[#allocation3 + $0x8] sm:$0xff]
        %v381 = vld [vmem:[#allocation3 + $0x10] sm:$0xff]
        %v382 = vld [vmem:[#allocation3 + $0x18] sm:$0xff]
        %v383 = vld [vmem:[#allocation3 + $0x20] sm:$0xff]
        %v384 = vld [vmem:[#allocation3 + $0x28] sm:$0xff]
        %v385 = vld [vmem:[#allocation3 + $0x30] sm:$0xff]
        %v386 = vld [vmem:[#allocation3 + $0x38] sm:$0xff]
        %v387 = vld [vmem:[#allocation3 + $0x40] sm:$0xff]
        %v388 = vld [vmem:[#allocation3 + $0x48] sm:$0xff]
        %v389 = vld [vmem:[#allocation3 + $0x50] sm:$0xff]
        %v390 = vld [vmem:[#allocation3 + $0x58] sm:$0xff]
        %v391 = vld [vmem:[#allocation3 + $0x60] sm:$0xff]
        %v392 = vld [vmem:[#allocation3 + $0x68] sm:$0xff]
        %v393 = vld [vmem:[#allocation3 + $0x70] sm:$0xff]
        %v394 = vld [vmem:[#allocation3 + $0x78] sm:$0xff]
        %v395 = vld [vmem:[%s2] sm:$0xf]
        %v396 = vld [vmem:[%s2 + $0x4] sm:$0xf]
        %v413 = vunpack.c.l.b16 %v363
        %v414 = vunpack.c.l.b16 %v364
        %v415 = vunpack.c.l.b16 %v365
        %v416 = vunpack.c.l.b16 %v366
        %v417 = vunpack.c.l.b16 %v367
        %v418 = vunpack.c.l.b16 %v368
        %v419 = vunpack.c.l.b16 %v369
        %v420 = vunpack.c.l.b16 %v370
        %v421 = vunpack.c.l.b16 %v371
        %v422 = vunpack.c.l.b16 %v372
        %v423 = vunpack.c.l.b16 %v373
        %v424 = vunpack.c.l.b16 %v374
        %v425 = vunpack.c.l.b16 %v375
        %v426 = vunpack.c.l.b16 %v376
        %v427 = vunpack.c.l.b16 %v377
        %v428 = vunpack.c.l.b16 %v378
        %v429 = vpack.c.b16 %v414, %v413
        %v430 = vpack.c.b16 %v416, %v415
        %v431 = vpack.c.b16 %v418, %v417
        %v432 = vpack.c.b16 %v420, %v419
        %v433 = vpack.c.b16 %v422, %v421
        %v434 = vpack.c.b16 %v424, %v423
        %v435 = vpack.c.b16 %v426, %v425
        %v436 = vpack.c.b16 %v428, %v427
        %v439 = vunpack.c.l.b16 %v395
        %v440 = vunpack.c.l.b16 %v396
        %v441 = vpack.c.b16 %v440, %v439
        %vm443 = vcmask 130048
        %v445 = vsel %vm443, %v429, 0
        %v448 = vsel %vm443, %v430, 0
        %v451 = vsel %vm443, %v431, 0
        %v454 = vsel %vm443, %v432, 0
        %v457 = vsel %vm443, %v433, 0
        %v460 = vsel %vm443, %v434, 0
        %v463 = vsel %vm443, %v435, 0
        %v466 = vsel %vm443, %v436, 0
        %468 = vmatpush.bf16.msra.mxu0 0
        %469 = vmatpush.bf16.msra.mxu0 0
        %470 = vmatpush.bf16.msra.mxu0 0
        %471 = vmatpush.bf16.msra.mxu0 0
        %472 = vmatpush.bf16.msra.mxu0 0
        %473 = vmatpush.bf16.msra.mxu0 0
        %474 = vmatpush.bf16.msra.mxu0 0
        %475 = vmatpush.bf16.msra.mxu0 %v441
        %476 = vmatmul.bf16.gmra.mxu0 %v445
        %v477 = vpop.f32.mrf.mxu0
        %v478 = vadd.f32 0.0, %v477
        %v479 = vpop.f32.mrf.mxu0
        %v480 = vadd.f32 0.0, %v479
        %481 = vmatmul.bf16.gmra.mxu0 %v448
        %v482 = vpop.f32.mrf.mxu0
        %v483 = vadd.f32 0.0, %v482
        %v484 = vpop.f32.mrf.mxu0
        %v485 = vadd.f32 0.0, %v484
        %486 = vmatmul.bf16.gmra.mxu0 %v451
        %v487 = vpop.f32.mrf.mxu0
        %v488 = vadd.f32 0.0, %v487
        %v489 = vpop.f32.mrf.mxu0
        %v490 = vadd.f32 0.0, %v489
        %491 = vmatmul.bf16.gmra.mxu0 %v454
        %v492 = vpop.f32.mrf.mxu0
        %v493 = vadd.f32 0.0, %v492
        %v494 = vpop.f32.mrf.mxu0
        %v495 = vadd.f32 0.0, %v494
        %496 = vmatmul.bf16.gmra.mxu0 %v457
        %v497 = vpop.f32.mrf.mxu0
        %v498 = vadd.f32 0.0, %v497
        %v499 = vpop.f32.mrf.mxu0
        %v500 = vadd.f32 0.0, %v499
        %501 = vmatmul.bf16.gmra.mxu0 %v460
        %v502 = vpop.f32.mrf.mxu0
        %v503 = vadd.f32 0.0, %v502
        %v504 = vpop.f32.mrf.mxu0
        %v505 = vadd.f32 0.0, %v504
        %506 = vmatmul.bf16.gmra.mxu0 %v463
        %v507 = vpop.f32.mrf.mxu0
        %v508 = vadd.f32 0.0, %v507
        %v509 = vpop.f32.mrf.mxu0
        %v510 = vadd.f32 0.0, %v509
        %511 = vmatmul.bf16.gmra.mxu0 %v466
        %v512 = vpop.f32.mrf.mxu0
        %v513 = vadd.f32 0.0, %v512
        %v514 = vpop.f32.mrf.mxu0
        %v515 = vadd.f32 0.0, %v514
        %516 = vdwg.mxu0
        %v517 = vadd.f32 %v379, %v478
        %v518 = vadd.f32 %v380, %v480
        %v519 = vadd.f32 %v381, %v483
        %v520 = vadd.f32 %v382, %v485
        %v521 = vadd.f32 %v383, %v488
        %v522 = vadd.f32 %v384, %v490
        %v523 = vadd.f32 %v385, %v493
        %v524 = vadd.f32 %v386, %v495
        %v525 = vadd.f32 %v387, %v498
        %v526 = vadd.f32 %v388, %v500
        %v527 = vadd.f32 %v389, %v503
        %v528 = vadd.f32 %v390, %v505
        %v529 = vadd.f32 %v391, %v508
        %v530 = vadd.f32 %v392, %v510
        %v531 = vadd.f32 %v393, %v513
        %v532 = vadd.f32 %v394, %v515
        %533 = vst [vmem:[#allocation3] sm:$0xff] %v517
        %534 = vst [vmem:[#allocation3 + $0x8] sm:$0xff] %v518
        %535 = vst [vmem:[#allocation3 + $0x10] sm:$0xff] %v519
        %536 = vst [vmem:[#allocation3 + $0x18] sm:$0xff] %v520
        %537 = vst [vmem:[#allocation3 + $0x20] sm:$0xff] %v521
        %538 = vst [vmem:[#allocation3 + $0x28] sm:$0xff] %v522
        %539 = vst [vmem:[#allocation3 + $0x30] sm:$0xff] %v523
        %540 = vst [vmem:[#allocation3 + $0x38] sm:$0xff] %v524
        %541 = vst [vmem:[#allocation3 + $0x40] sm:$0xff] %v525
        %542 = vst [vmem:[#allocation3 + $0x48] sm:$0xff] %v526
        %543 = vst [vmem:[#allocation3 + $0x50] sm:$0xff] %v527
        %544 = vst [vmem:[#allocation3 + $0x58] sm:$0xff] %v528
        %545 = vst [vmem:[#allocation3 + $0x60] sm:$0xff] %v529
        %546 = vst [vmem:[#allocation3 + $0x68] sm:$0xff] %v530
        %547 = vst [vmem:[#allocation3 + $0x70] sm:$0xff] %v531
        %548 = vst [vmem:[#allocation3 + $0x78] sm:$0xff] %v532
        %v549 = vld [vmem:[#allocation3] sm:$0xff]
        %v550 = vld [vmem:[#allocation3 + $0x8] sm:$0xff]
        %v551 = vld [vmem:[#allocation3 + $0x10] sm:$0xff]
        %v552 = vld [vmem:[#allocation3 + $0x18] sm:$0xff]
        %v553 = vld [vmem:[#allocation3 + $0x20] sm:$0xff]
        %v554 = vld [vmem:[#allocation3 + $0x28] sm:$0xff]
        %v555 = vld [vmem:[#allocation3 + $0x30] sm:$0xff]
        %v556 = vld [vmem:[#allocation3 + $0x38] sm:$0xff]
        %v557 = vld [vmem:[#allocation3 + $0x40] sm:$0xff]
        %v558 = vld [vmem:[#allocation3 + $0x48] sm:$0xff]
        %v559 = vld [vmem:[#allocation3 + $0x50] sm:$0xff]
        %v560 = vld [vmem:[#allocation3 + $0x58] sm:$0xff]
        %v561 = vld [vmem:[#allocation3 + $0x60] sm:$0xff]
        %v562 = vld [vmem:[#allocation3 + $0x68] sm:$0xff]
        %v563 = vld [vmem:[#allocation3 + $0x70] sm:$0xff]
        %v564 = vld [vmem:[#allocation3 + $0x78] sm:$0xff]
        %v565 = vld [vmem:[%s3] sm:$0x1]
        %v567 = vperm.slane %v565, 0
        %v569 = vadd.f32 %v549, %v567
        %v570 = vadd.f32 %v550, %v567
        %v571 = vadd.f32 %v551, %v567
        %v572 = vadd.f32 %v552, %v567
        %v573 = vadd.f32 %v553, %v567
        %v574 = vadd.f32 %v554, %v567
        %v575 = vadd.f32 %v555, %v567
        %v576 = vadd.f32 %v556, %v567
        %v577 = vadd.f32 %v557, %v567
        %v578 = vadd.f32 %v558, %v567
        %v579 = vadd.f32 %v559, %v567
        %v580 = vadd.f32 %v560, %v567
        %v581 = vadd.f32 %v561, %v567
        %v582 = vadd.f32 %v562, %v567
        %v583 = vadd.f32 %v563, %v567
        %v584 = vadd.f32 %v564, %v567
        %vm585 = vcmp.ge.f32.partialorder %v569, 0.0
        %vm586 = vcmp.ge.f32.partialorder %v570, 0.0
        %vm587 = vcmp.ge.f32.partialorder %v571, 0.0
        %vm588 = vcmp.ge.f32.partialorder %v572, 0.0
        %vm589 = vcmp.ge.f32.partialorder %v573, 0.0
        %vm590 = vcmp.ge.f32.partialorder %v574, 0.0
        %vm591 = vcmp.ge.f32.partialorder %v575, 0.0
        %vm592 = vcmp.ge.f32.partialorder %v576, 0.0
        %vm593 = vcmp.ge.f32.partialorder %v577, 0.0
        %vm594 = vcmp.ge.f32.partialorder %v578, 0.0
        %vm595 = vcmp.ge.f32.partialorder %v579, 0.0
        %vm596 = vcmp.ge.f32.partialorder %v580, 0.0
        %vm597 = vcmp.ge.f32.partialorder %v581, 0.0
        %vm598 = vcmp.ge.f32.partialorder %v582, 0.0
        %vm599 = vcmp.ge.f32.partialorder %v583, 0.0
        %vm600 = vcmp.ge.f32.partialorder %v584, 0.0
        %v601 = vmul.f32 %v569, 0.1
        %v602 = vmul.f32 %v570, 0.1
        %v603 = vmul.f32 %v571, 0.1
        %v604 = vmul.f32 %v572, 0.1
        %v605 = vmul.f32 %v573, 0.1
        %v606 = vmul.f32 %v574, 0.1
        %v607 = vmul.f32 %v575, 0.1
        %v608 = vmul.f32 %v576, 0.1
        %v609 = vmul.f32 %v577, 0.1
        %v610 = vmul.f32 %v578, 0.1
        %v611 = vmul.f32 %v579, 0.1
        %v612 = vmul.f32 %v580, 0.1
        %v613 = vmul.f32 %v581, 0.1
        %v614 = vmul.f32 %v582, 0.1
        %v615 = vmul.f32 %v583, 0.1
        %v616 = vmul.f32 %v584, 0.1
        %v617 = vsel %vm585, %v569, %v601
        %v618 = vsel %vm586, %v570, %v602
        %v619 = vsel %vm587, %v571, %v603
        %v620 = vsel %vm588, %v572, %v604
        %v621 = vsel %vm589, %v573, %v605
        %v622 = vsel %vm590, %v574, %v606
        %v623 = vsel %vm591, %v575, %v607
        %v624 = vsel %vm592, %v576, %v608
        %v625 = vsel %vm593, %v577, %v609
        %v626 = vsel %vm594, %v578, %v610
        %v627 = vsel %vm595, %v579, %v611
        %v628 = vsel %vm596, %v580, %v612
        %v629 = vsel %vm597, %v581, %v613
        %v630 = vsel %vm598, %v582, %v614
        %v631 = vsel %vm599, %v583, %v615
        %v632 = vsel %vm600, %v584, %v616
        %v633 = vpack.c.bf16 %v617, %v617
        %v634 = vpack.c.bf16 %v618, %v618
        %v635 = vpack.c.bf16 %v619, %v619
        %v636 = vpack.c.bf16 %v620, %v620
        %v637 = vpack.c.bf16 %v621, %v621
        %v638 = vpack.c.bf16 %v622, %v622
        %v639 = vpack.c.bf16 %v623, %v623
        %v640 = vpack.c.bf16 %v624, %v624
        %v641 = vpack.c.bf16 %v625, %v625
        %v642 = vpack.c.bf16 %v626, %v626
        %v643 = vpack.c.bf16 %v627, %v627
        %v644 = vpack.c.bf16 %v628, %v628
        %v645 = vpack.c.bf16 %v629, %v629
        %v646 = vpack.c.bf16 %v630, %v630
        %v647 = vpack.c.bf16 %v631, %v631
        %v648 = vpack.c.bf16 %v632, %v632
        %649 = vst [vmem:[%s263] sm:$0xf] %v633
        %650 = vst [vmem:[%s263 + $0x4] sm:$0xf] %v634
        %651 = vst [vmem:[%s263 + $0x8] sm:$0xf] %v635
        %652 = vst [vmem:[%s263 + $0xc] sm:$0xf] %v636
        %653 = vst [vmem:[%s263 + $0x10] sm:$0xf] %v637
        %654 = vst [vmem:[%s263 + $0x14] sm:$0xf] %v638
        %655 = vst [vmem:[%s263 + $0x18] sm:$0xf] %v639
        %656 = vst [vmem:[%s263 + $0x1c] sm:$0xf] %v640
        %657 = vst [vmem:[%s263 + $0x20] sm:$0xf] %v641
        %658 = vst [vmem:[%s263 + $0x24] sm:$0xf] %v642
        %659 = vst [vmem:[%s263 + $0x28] sm:$0xf] %v643
        %660 = vst [vmem:[%s263 + $0x2c] sm:$0xf] %v644
        %661 = vst [vmem:[%s263 + $0x30] sm:$0xf] %v645
        %662 = vst [vmem:[%s263 + $0x34] sm:$0xf] %v646
        %663 = vst [vmem:[%s263 + $0x38] sm:$0xf] %v647
        %664 = vst [vmem:[%s263 + $0x3c] sm:$0xf] %v648
        %s665 = sand.u32 %s142, 1
        %s666 = scalar_lea.sflag [#allocation5], %s665
        %s667 = sand.u32 %s142, 1
        %s668 = smul.addr %s667, 64
        %s669 = scalar_lea.vmem [#allocation4], %s668
        // Predicated region
        $region37: #{tpu_custom_call.1} parent=35 // pred_check
          %p670 = pneg %p152
        $region38: #{tpu_custom_call.1} parent=35 // pred_check_branch
          %672 = sbr.rel (%p670) target = $region40
        $region39: #{tpu_custom_call.1} parent=35 // pred_region
          %s673 = smul.u32 16, %s23
          %675 = vsyncadd %s666, 0
          %s676 = smul.addr %s22, 16
          %s677 = sadd.s32 %s673, %s676
          %s678 = smul.addr %s677, 4
          %s679 = scalar_lea.hbm %s4, %s678
          %s680 = sshll.u32 %s669, 4
          %s681 = int_to_ptr.vmem [resolvable:$true] %s680
          %s682 = sshll.u32 %s679, 4
          %s683 = int_to_ptr.hbm [resolvable:$true] %s682
          %688 = dma.vmem_to_hbm [thread:$0]  %s681, 1024, %s683, %s666, 64, 64, 4
        $region40: #{tpu_custom_call.1} parent=35 // pred_fallthru
          _
      $region36: #{tpu_custom_call.1} parent=5 // pred_fallthru
        _
      %p689 = scmp.le.s32.totalorder 2, %s13
      // Predicated region
      $region41: #{tpu_custom_call.1} parent=5 // pred_check
        %p690 = pneg %p689
      $region42: #{tpu_custom_call.1} parent=5 // pred_check_branch
        %692 = sbr.rel (%p690) target = $region44
      $region43: #{tpu_custom_call.1} parent=5 // pred_region
        %s693 = ssub.s32 %s13, 2
        // Predicated region
        $region45: #{tpu_custom_call.1} parent=43 // pred_check
          %p694 = pneg %p158
        $region46: #{tpu_custom_call.1} parent=43 // pred_check_branch
          %696 = sbr.rel (%p694) target = $region48
        $region47: #{tpu_custom_call.1} parent=43 // pred_region
          %s697 = sand.u32 %s143, 1
          %s698 = scalar_lea.sflag [#allocation5], %s697
          %s699 = sand.u32 %s143, 1
          %s700 = smul.addr %s699, 64
          %s701 = scalar_lea.vmem [#allocation4], %s700
          %703 = dma.done %s698, 1024
        $region48: #{tpu_custom_call.1} parent=43 // pred_fallthru
          _
      $region44: #{tpu_custom_call.1} parent=5 // pred_fallthru
        _
    $region6: #{tpu_custom_call.1} parent=1 // loop_footer
      %s17 = sadd.s32 1, %s13
    $region7: #{tpu_custom_call.1} parent=1 // loop_footer_branch
      %12 = sbr.rel target = $region3
    $region8: #{tpu_custom_call.1} parent=1 // loop_exit
      _
    %704 = vsyncpa [#allocation5], 1
    %s705 = scalar_lea.sflag [#allocation5], 1
    %706 = vsyncpa %s705, 1

</llo_original>
